<compile_context>
chip_gen: v7x
topology: tpu7x:2x2x1
jax: 0.10.0
libtpu: 0.0.40
codegen_flags: <defaults>
</compile_context>

<pallas_src>
import functools

import jax
import jax.numpy as jnp
from jax import lax
from jax.experimental import pallas as pl
from jax.experimental.pallas import tpu as pltpu


# ----------------------------------------------------------------------------
# small helpers
# ----------------------------------------------------------------------------
def _layernorm(x, gamma, beta, eps=1e-5):
    mean = jnp.mean(x, axis=-1, keepdims=True)
    var = jnp.mean((x - mean) ** 2, axis=-1, keepdims=True)
    return (x - mean) * lax.rsqrt(var + eps) * gamma + beta


def _gelu_exact(x):
    return 0.5 * x * (1.0 + lax.erf(x * (1.0 / jnp.sqrt(jnp.float32(2.0)))))


def _vmem_limit_bytes():
    """Generation-aware scoped-VMEM budget (falls back to 32 MiB)."""
    try:
        cap = getattr(pltpu.get_tpu_info(), "vmem_capacity_bytes", None)
        if cap:
            return int(min(cap * 3 // 4, 100 * 1024 * 1024))
    except Exception:
        pass
    return 32 * 1024 * 1024


# ----------------------------------------------------------------------------
# Kernel 1: fused QKV projection (computed once per token)
# ----------------------------------------------------------------------------
def qkv_proj_kernel(x_ref, w_ref, b_ref, q_ref, k_ref, v_ref, *, scale):
    E = q_ref.shape[-1]
    xb = x_ref[...].astype(jnp.bfloat16)
    qkv = jnp.dot(xb, w_ref[...], preferred_element_type=jnp.float32) + b_ref[0]
    q_ref[...] = (qkv[:, :E] * scale).astype(jnp.bfloat16)       # scale folded into q
    k_ref[...] = qkv[:, E:2 * E].astype(jnp.bfloat16)
    v_ref[...] = qkv[:, 2 * E:].astype(jnp.bfloat16)


# ----------------------------------------------------------------------------
# Kernel 2: flash attention (causal) + output projection + residual + LN1
# ----------------------------------------------------------------------------
def flash_attn_ln1_kernel(x_ref, q_ref, k_ref, v_ref, wo_ref, aux_ref,
                          y_ref, m_sc, l_sc, acc_sc):
    H, TQ, D = q_ref.shape
    TK = k_ref.shape[1]
    E = x_ref.shape[-1]
    qi = pl.program_id(1)
    ki = pl.program_id(2)

    @pl.when(ki == 0)
    def _():
        m_sc[...] = jnp.full_like(m_sc, -1e30)
        l_sc[...] = jnp.zeros_like(l_sc)
        acc_sc[...] = jnp.zeros_like(acc_sc)

    # Skip KV tiles that lie entirely above the causal diagonal.
    @pl.when(ki * TK <= qi * TQ + (TQ - 1))
    def _():
        s = jnp.einsum("hqd,hkd->hqk", q_ref[...], k_ref[...],
                       preferred_element_type=jnp.float32)        # (H, TQ, TK)
        row = qi * TQ + lax.broadcasted_iota(jnp.int32, (TQ, TK), 0)
        col = ki * TK + lax.broadcasted_iota(jnp.int32, (TQ, TK), 1)
        s = s + jnp.where(col > row, jnp.float32(-1e30), jnp.float32(0.0))[None]

        m_prev = m_sc[...]
        m_new = jnp.maximum(m_prev, jnp.max(s, axis=-1, keepdims=True))
        alpha = jnp.exp(m_prev - m_new)
        p = jnp.exp(s - m_new)                                     # unnormalized
        l_sc[...] = alpha * l_sc[...] + jnp.sum(p, axis=-1, keepdims=True)
        acc_sc[...] = alpha * acc_sc[...] + jnp.einsum(
            "hqk,hkd->hqd", p.astype(jnp.bfloat16), v_ref[...],
            preferred_element_type=jnp.float32)
        m_sc[...] = m_new

    @pl.when(ki == pl.num_programs(2) - 1)
    def _():
        # normalize AFTER the PV matmul: touches (H,TQ,D), not (H,TQ,S)
        o = (acc_sc[...] * pl.reciprocal(l_sc[...], approx=True)).astype(jnp.bfloat16)
        # head merge folded into output projection (wo reshaped to (H,D,E))
        attn = jnp.zeros((TQ, E), jnp.float32)
        for h in range(H):
            attn = attn + jnp.dot(o[h], wo_ref[h],
                                  preferred_element_type=jnp.float32)
        attn = attn + aux_ref[0]                                   # out-proj bias
        y_ref[...] = _layernorm(x_ref[...] + attn, aux_ref[1], aux_ref[2])


# ----------------------------------------------------------------------------
# Kernel 3: MLP (Linear -> GELU -> Linear, F tiled on grid) + residual + LN2
# ----------------------------------------------------------------------------
def mlp_ln2_kernel(y_ref, w1_ref, b1_ref, w2_ref, aux_ref, out_ref, acc_sc):
    fi = pl.program_id(2)

    @pl.when(fi == 0)
    def _():
        acc_sc[...] = jnp.zeros_like(acc_sc)

    yb = y_ref[...].astype(jnp.bfloat16)
    h1 = jnp.dot(yb, w1_ref[...], preferred_element_type=jnp.float32) + b1_ref[0]
    g = _gelu_exact(h1).astype(jnp.bfloat16)
    acc_sc[...] += jnp.dot(g, w2_ref[...], preferred_element_type=jnp.float32)

    @pl.when(fi == pl.num_programs(2) - 1)
    def _():
        h2 = acc_sc[...] + aux_ref[0]
        out_ref[...] = _layernorm(y_ref[...] + h2, aux_ref[1], aux_ref[2])


# ----------------------------------------------------------------------------
# Wrapper
# ----------------------------------------------------------------------------
def transformer_block(x, params, *, num_heads,
                      q_tile=256, kv_tile=256, f_tile=512):
    B, S, E = x.shape
    H = num_heads
    D = E // H
    F = params["w1_t"].shape[1]

    TQ = q_tile if (S > q_tile and S % q_tile == 0) else S
    TK = kv_tile if (S > kv_tile and S % kv_tile == 0) else S
    TF = f_tile if (F > f_tile and F % f_tile == 0) else F
    n_q, n_kv, n_f = S // TQ, S // TK, F // TF

    vmem_limit = _vmem_limit_bytes()

    # fused QKV weights / biases; wo reshaped head-major; small vectors stacked
    wqkv = jnp.concatenate([params["wq_t"], params["wk_t"], params["wv_t"]], axis=1)
    bqkv = jnp.concatenate([params["bq"], params["bk"], params["bv"]], axis=1)
    wo_h = params["wo_t"].reshape(H, D, E)
    aux1 = jnp.concatenate([params["bo"], params["g1"], params["be1"]], axis=0)   # (3,E)
    aux2 = jnp.concatenate([params["bm2"], params["g2"], params["be2"]], axis=0)  # (3,E)

    # ---- Kernel 1: QKV projection ----
    q, k, v = pl.pallas_call(
        functools.partial(qkv_proj_kernel, scale=1.0 / (D ** 0.5)),
        grid=(B, n_q),
        in_specs=[
            pl.BlockSpec((None, TQ, E), lambda b, i: (b, i, 0)),
            pl.BlockSpec((E, 3 * E), lambda b, i: (0, 0)),
            pl.BlockSpec((1, 3 * E), lambda b, i: (0, 0)),
        ],
        out_specs=[
            pl.BlockSpec((None, TQ, E), lambda b, i: (b, i, 0)),
            pl.BlockSpec((None, TQ, E), lambda b, i: (b, i, 0)),
            pl.BlockSpec((None, TQ, E), lambda b, i: (b, i, 0)),
        ],
        out_shape=[jax.ShapeDtypeStruct((B, S, E), jnp.bfloat16)] * 3,
        compiler_params=pltpu.CompilerParams(
            dimension_semantics=("parallel", "parallel"),
            vmem_limit_bytes=vmem_limit),
    )(x, wqkv, bqkv)

    # head split done in the wrapper (layout plumbing, keeps kernel relayout-free)
    def split_heads(t):
        return t.reshape(B, S, H, D).transpose(0, 2, 1, 3)        # (B,H,S,D) bf16
    qh, kh, vh = split_heads(q), split_heads(k), split_heads(v)

    # ---- Kernel 2: flash attention + out-proj + residual + LN1 ----
    y = pl.pallas_call(
        flash_attn_ln1_kernel,
        grid=(B, n_q, n_kv),
        in_specs=[
            pl.BlockSpec((None, TQ, E), lambda b, i, j: (b, i, 0)),      # x (residual)
            pl.BlockSpec((None, H, TQ, D), lambda b, i, j: (b, 0, i, 0)),  # q
            pl.BlockSpec((None, H, TK, D), lambda b, i, j: (b, 0, j, 0)),  # k
            pl.BlockSpec((None, H, TK, D), lambda b, i, j: (b, 0, j, 0)),  # v
            pl.BlockSpec((H, D, E), lambda b, i, j: (0, 0, 0)),          # wo (H,D,E)
            pl.BlockSpec((3, E), lambda b, i, j: (0, 0)),                # bo/g1/be1
        ],
        out_specs=pl.BlockSpec((None, TQ, E), lambda b, i, j: (b, i, 0)),
        out_shape=jax.ShapeDtypeStruct((B, S, E), jnp.float32),
        scratch_shapes=[
            pltpu.VMEM((H, TQ, 1), jnp.float32),   # running max
            pltpu.VMEM((H, TQ, 1), jnp.float32),   # running sum
            pltpu.VMEM((H, TQ, D), jnp.float32),   # output accumulator
        ],
        compiler_params=pltpu.CompilerParams(
            dimension_semantics=("parallel", "parallel", "arbitrary"),
            vmem_limit_bytes=vmem_limit),
    )(x, qh, kh, vh, wo_h, aux1)

    # ---- Kernel 3: MLP (F tiled on grid) + residual + LN2 ----
    out = pl.pallas_call(
        mlp_ln2_kernel,
        grid=(B, n_q, n_f),
        in_specs=[
            pl.BlockSpec((None, TQ, E), lambda b, i, j: (b, i, 0)),  # y
            pl.BlockSpec((E, TF), lambda b, i, j: (0, j)),           # w1 tile
            pl.BlockSpec((1, TF), lambda b, i, j: (0, j)),           # b1 tile
            pl.BlockSpec((TF, E), lambda b, i, j: (j, 0)),           # w2 tile
            pl.BlockSpec((3, E), lambda b, i, j: (0, 0)),            # bm2/g2/be2
        ],
        out_specs=pl.BlockSpec((None, TQ, E), lambda b, i, j: (b, i, 0)),
        out_shape=jax.ShapeDtypeStruct((B, S, E), jnp.float32),
        scratch_shapes=[pltpu.VMEM((TQ, E), jnp.float32)],
        compiler_params=pltpu.CompilerParams(
            dimension_semantics=("parallel", "parallel", "arbitrary"),
            vmem_limit_bytes=vmem_limit),
    )(y, params["w1_t"], params["bm1"], params["w2_t"], aux2)

    return out


# ----------------------------------------------------------------------------
# Params / reference
# ----------------------------------------------------------------------------
def init_params(key, embed_dim, feedforward_dim):
    E, F = embed_dim, feedforward_dim
    ks = jax.random.split(key, 8)
    std = 0.02

    def w(k, shape, dtype=jnp.bfloat16):
        return (std * jax.random.normal(k, shape)).astype(dtype)

    # PyTorch Linear stores weight (out, in); we pre-transpose to (in, out).
    # Matmul weights live in bf16 (MXU-native); biases / LN params stay f32.
    return dict(
        wq_t=w(ks[0], (E, E)),
        wk_t=w(ks[1], (E, E)),
        wv_t=w(ks[2], (E, E)),
        wo_t=w(ks[3], (E, E)),
        w1_t=w(ks[4], (E, F)),
        w2_t=w(ks[5], (F, E)),
        bq=w(ks[6], (1, E), jnp.float32),
        bk=w(ks[7], (1, E), jnp.float32),
        bv=jnp.zeros((1, E), jnp.float32),
        bo=jnp.zeros((1, E), jnp.float32),
        bm1=jnp.zeros((1, F), jnp.float32),
        bm2=jnp.zeros((1, E), jnp.float32),
        g1=jnp.ones((1, E), jnp.float32),
        be1=jnp.zeros((1, E), jnp.float32),
        g2=jnp.ones((1, E), jnp.float32),
        be2=jnp.zeros((1, E), jnp.float32),
    )


def reference(x, p, num_heads):
    """Pure-JAX f32 reference of TransformerBlock.forward (eval, no padding mask)."""
    B, S, E = x.shape
    D = E // num_heads
    wq = p["wq_t"].astype(jnp.float32)
    wk = p["wk_t"].astype(jnp.float32)
    wv = p["wv_t"].astype(jnp.float32)
    wo = p["wo_t"].astype(jnp.float32)
    w1 = p["w1_t"].astype(jnp.float32)
    w2 = p["w2_t"].astype(jnp.float32)

    q = x @ wq + p["bq"][0]
    k = x @ wk + p["bk"][0]
    v = x @ wv + p["bv"][0]
    q = q.reshape(B, S, num_heads, D).transpose(0, 2, 1, 3) / jnp.sqrt(jnp.float32(D))
    k = k.reshape(B, S, num_heads, D).transpose(0, 2, 1, 3)
    v = v.reshape(B, S, num_heads, D).transpose(0, 2, 1, 3)
    s = jnp.einsum("bhsd,bhtd->bhst", q, k)
    mask = jnp.triu(jnp.ones((S, S), bool), k=1)
    s = jnp.where(mask, -jnp.inf, s)
    a = jax.nn.softmax(s, axis=-1)
    o = jnp.einsum("bhst,bhtd->bhsd", a, v).transpose(0, 2, 1, 3).reshape(B, S, E)
    attn_out = o @ wo + p["bo"][0]

    def ln(z, g, b):
        m = z.mean(-1, keepdims=True)
        var = ((z - m) ** 2).mean(-1, keepdims=True)
        return (z - m) / jnp.sqrt(var + 1e-5) * g + b

    y = ln(x + attn_out, p["g1"][0], p["be1"][0])
    h = y @ w1 + p["bm1"][0]
    h = 0.5 * h * (1.0 + jax.scipy.special.erf(h / jnp.sqrt(2.0)))
    h = h @ w2 + p["bm2"][0]
    return ln(y + h, p["g2"][0], p["be2"][0])


if __name__ == "__main__":
    B, S, E, F, H = 2, 8, 32, 64, 4

    key = jax.random.PRNGKey(0)
    kx, kp = jax.random.split(key)
    x = jax.random.normal(kx, (B, S, E), dtype=jnp.float32)
    params = init_params(kp, E, F)

    out = transformer_block(x, params, num_heads=H)
    out = jax.block_until_ready(out)

    ref = reference(x, params, H)
    assert out.shape == (B, S, E)
    assert jnp.allclose(out, ref, rtol=1e-3, atol=1e-3), "mismatch vs JAX reference"

    print("KERNEL_OK")
</pallas_src>

<mosaic_0001>
module attributes {stable_mosaic.version = 11 : i64} {
  func.func @qkv_proj_kernel(%arg0: i32, %arg1: i32, %arg2: memref<1x8x32xf32, #tpu.memory_space<vmem>>, %arg3: memref<32x96xbf16, #tpu.memory_space<vmem>>, %arg4: memref<1x96xf32, #tpu.memory_space<vmem>>, %arg5: memref<1x8x32xbf16, #tpu.memory_space<vmem>>, %arg6: memref<1x8x32xbf16, #tpu.memory_space<vmem>>, %arg7: memref<1x8x32xbf16, #tpu.memory_space<vmem>>) attributes {dimension_semantics = [#tpu.dimension_semantics<parallel>, #tpu.dimension_semantics<parallel>], iteration_bounds = array<i64: 2, 1>, scalar_prefetch = 0 : i64, scratch_operands = 0 : i64, tpu.core_type = #tpu.core_type<tc>, window_params = [{transform_indices = @transform_0, window_bounds = array<i64: 1, 8, 32>}, {pipeline_mode = #tpu.pipeline_mode<synchronous>, transform_indices = @transform_1, window_bounds = array<i64: 32, 96>}, {pipeline_mode = #tpu.pipeline_mode<synchronous>, transform_indices = @transform_2, window_bounds = array<i64: 1, 96>}, {transform_indices = @transform_3, window_bounds = array<i64: 1, 8, 32>}, {transform_indices = @transform_4, window_bounds = array<i64: 1, 8, 32>}, {transform_indices = @transform_5, window_bounds = array<i64: 1, 8, 32>}]} {
    %c0 = arith.constant 0 : index
    %c0_0 = arith.constant 0 : index
    %c0_1 = arith.constant 0 : index
    %0 = vector.load %arg2[%c0, %c0_0, %c0_1] : memref<1x8x32xf32, #tpu.memory_space<vmem>>, vector<1x8x32xf32>
    %1 = vector.shape_cast %0 : vector<1x8x32xf32> to vector<8x32xf32>
    %2 = arith.truncf %1 : vector<8x32xf32> to vector<8x32xbf16>
    %c0_2 = arith.constant 0 : index
    %c0_3 = arith.constant 0 : index
    %3 = vector.load %arg3[%c0_2, %c0_3] : memref<32x96xbf16, #tpu.memory_space<vmem>>, vector<32x96xbf16>
    %cst = arith.constant dense<0.000000e+00> : vector<8x96xf32>
    %4 = tpu.matmul %2, %3, %cst {dimension_numbers = #tpu.dot_dimension_numbers<[1], [0], [0], [1], [0, 0, 1, 1], [], []>} : vector<8x32xbf16>, vector<32x96xbf16>, vector<8x96xf32> -> vector<8x96xf32>
    %c0_4 = arith.constant 0 : index
    %c0_5 = arith.constant 0 : index
    %5 = vector.load %arg4[%c0_4, %c0_5] : memref<1x96xf32, #tpu.memory_space<vmem>>, vector<1x96xf32>
    %6 = vector.shape_cast %5 : vector<1x96xf32> to vector<96xf32>
    %7 = vector.shape_cast %6 : vector<96xf32> to vector<1x96xf32>
    %8 = vector.broadcast %7 : vector<1x96xf32> to vector<8x96xf32>
    %9 = arith.addf %4, %8 : vector<8x96xf32>
    %10 = vector.extract_strided_slice %9 {offsets = [0, 0], sizes = [8, 32], strides = [1, 1]} : vector<8x96xf32> to vector<8x32xf32>
    %cst_6 = arith.constant 0.353553385 : f32
    %11 = vector.broadcast %cst_6 : f32 to vector<8x32xf32>
    %12 = arith.mulf %10, %11 : vector<8x32xf32>
    %13 = arith.truncf %12 : vector<8x32xf32> to vector<8x32xbf16>
    %c0_7 = arith.constant 0 : index
    %c0_8 = arith.constant 0 : index
    %c0_9 = arith.constant 0 : index
    %14 = vector.load %arg5[%c0_7, %c0_8, %c0_9] : memref<1x8x32xbf16, #tpu.memory_space<vmem>>, vector<1x8x32xbf16>
    %15 = vector.shape_cast %14 : vector<1x8x32xbf16> to vector<8x32xbf16>
    %16 = vector.shape_cast %13 : vector<8x32xbf16> to vector<1x8x32xbf16>
    tpu.vector_store %arg5[%c0_7, %c0_8, %c0_9], %16 {strides = array<i32>} : memref<1x8x32xbf16, #tpu.memory_space<vmem>>, vector<1x8x32xbf16>,
    %17 = vector.extract_strided_slice %9 {offsets = [0, 32], sizes = [8, 32], strides = [1, 1]} : vector<8x96xf32> to vector<8x32xf32>
    %18 = arith.truncf %17 : vector<8x32xf32> to vector<8x32xbf16>
    %c0_10 = arith.constant 0 : index
    %c0_11 = arith.constant 0 : index
    %c0_12 = arith.constant 0 : index
    %19 = vector.load %arg6[%c0_10, %c0_11, %c0_12] : memref<1x8x32xbf16, #tpu.memory_space<vmem>>, vector<1x8x32xbf16>
    %20 = vector.shape_cast %19 : vector<1x8x32xbf16> to vector<8x32xbf16>
    %21 = vector.shape_cast %18 : vector<8x32xbf16> to vector<1x8x32xbf16>
    tpu.vector_store %arg6[%c0_10, %c0_11, %c0_12], %21 {strides = array<i32>} : memref<1x8x32xbf16, #tpu.memory_space<vmem>>, vector<1x8x32xbf16>,
    %22 = vector.extract_strided_slice %9 {offsets = [0, 64], sizes = [8, 32], strides = [1, 1]} : vector<8x96xf32> to vector<8x32xf32>
    %23 = arith.truncf %22 : vector<8x32xf32> to vector<8x32xbf16>
    %c0_13 = arith.constant 0 : index
    %c0_14 = arith.constant 0 : index
    %c0_15 = arith.constant 0 : index
    %24 = vector.load %arg7[%c0_13, %c0_14, %c0_15] : memref<1x8x32xbf16, #tpu.memory_space<vmem>>, vector<1x8x32xbf16>
    %25 = vector.shape_cast %24 : vector<1x8x32xbf16> to vector<8x32xbf16>
    %26 = vector.shape_cast %23 : vector<8x32xbf16> to vector<1x8x32xbf16>
    tpu.vector_store %arg7[%c0_13, %c0_14, %c0_15], %26 {strides = array<i32>} : memref<1x8x32xbf16, #tpu.memory_space<vmem>>, vector<1x8x32xbf16>,
    return
  }
  func.func @transform_0(%arg0: i32, %arg1: i32) -> (i32, i32, i32) {
    %c0_i32 = arith.constant 0 : i32
    %c0_i32_0 = arith.constant 0 : i32
    return %arg0, %arg1, %c0_i32 : i32, i32, i32
  }
  func.func @transform_1(%arg0: i32, %arg1: i32) -> (i32, i32) {
    %c0_i32 = arith.constant 0 : i32
    %c0_i32_0 = arith.constant 0 : i32
    %c0_i32_1 = arith.constant 0 : i32
    return %c0_i32, %c0_i32_0 : i32, i32
  }
  func.func @transform_2(%arg0: i32, %arg1: i32) -> (i32, i32) {
    %c0_i32 = arith.constant 0 : i32
    %c0_i32_0 = arith.constant 0 : i32
    %c0_i32_1 = arith.constant 0 : i32
    return %c0_i32, %c0_i32_0 : i32, i32
  }
  func.func @transform_3(%arg0: i32, %arg1: i32) -> (i32, i32, i32) {
    %c0_i32 = arith.constant 0 : i32
    %c0_i32_0 = arith.constant 0 : i32
    return %arg0, %arg1, %c0_i32 : i32, i32, i32
  }
  func.func @transform_4(%arg0: i32, %arg1: i32) -> (i32, i32, i32) {
    %c0_i32 = arith.constant 0 : i32
    %c0_i32_0 = arith.constant 0 : i32
    return %arg0, %arg1, %c0_i32 : i32, i32, i32
  }
  func.func @transform_5(%arg0: i32, %arg1: i32) -> (i32, i32, i32) {
    %c0_i32 = arith.constant 0 : i32
    %c0_i32_0 = arith.constant 0 : i32
    return %arg0, %arg1, %c0_i32 : i32, i32, i32
  }
}

</mosaic_0001>

<llo_original>
// kernel: tpu_custom_call.1
$region0: #{tpu_custom_call.1}
  #allocation0 [shape = 'u32[]', space=smem, size = 0x4, offset = 0x4, fixed_abs, tag = 'smem constant byte address 0x4 - core index']
  #allocation1 [shape = 'u32[144,128]{1,0:T(1,128)}', space=vmem, size = 0x12000, scoped, tag = 'internal scratch']
  %s0 = inlined_call_operand.hbm [shape: f32[2,8,32], index: 0, kind: input, shape index: {}]
  %s1 = inlined_call_operand.hbm [shape: bf16[32,96], index: 1, kind: input, shape index: {}]
  %s2 = inlined_call_operand.vmem [shape: f32[1,96], index: 2, kind: input, shape index: {}]
  %s3 = inlined_call_operand.hbm [shape: bf16[2,8,32], index: 3, kind: output, shape index: {0}]
  %s4 = inlined_call_operand.hbm [shape: bf16[2,8,32], index: 4, kind: output, shape index: {1}]
  %s5 = inlined_call_operand.hbm [shape: bf16[2,8,32], index: 5, kind: output, shape index: {2}]
  %6 = xla_tuple %s3, %s4, %s5
  %s7 = sld [smem:[#allocation0]]
  $region69: #{tpu_custom_call.1} parent=0
    _
  %s9 = ssub.s32 1, %s7
  %s10 = scalar_select 0, %s9, %s7
  $region1: #{tpu_custom_call.1} parent=0
    #allocation2 [shape = 'u8[8192]{0}', space=vmem, size = 0x2000, scoped, tag = 'input window, operand 0']
    #allocation3 [shape = 's32[2]{0}', space=sflag, size = 0x8, scoped, tag = 'scoped memory for tpu_custom_call.1']
    #allocation4 [shape = 's32[2]{0}', space=sflag, size = 0x8, scoped, tag = 'scoped memory for tpu_custom_call.1']
    #allocation5 [shape = 'u8[8192]{0}', space=vmem, size = 0x2000, scoped, tag = 'input window, operand 1, single buffered']
    #allocation6 [shape = 's32[1]{0}', space=sflag, size = 0x4, scoped, tag = 'scoped memory for tpu_custom_call.1']
    #allocation7 [shape = 'u8[4096]{0}', space=vmem, size = 0x1000, scoped, tag = 'output window, operand 0']
    #allocation8 [shape = 'u8[4096]{0}', space=vmem, size = 0x1000, scoped, tag = 'output window, operand 1']
    #allocation9 [shape = 's32[2]{0}', space=sflag, size = 0x8, scoped, tag = 'scoped memory for tpu_custom_call.1']
    #allocation10 [shape = 'u8[4096]{0}', space=vmem, size = 0x1000, scoped, tag = 'output window, operand 2']
    %11 = vsyncpa [#allocation3], 0
    %s12 = scalar_lea.sflag [#allocation3], 1
    %13 = vsyncpa %s12, 0
    %14 = vsyncpa [#allocation6], 0
    %15 = vsyncpa [#allocation4], 0
    %s16 = scalar_lea.sflag [#allocation4], 1
    %17 = vsyncpa %s16, 0
    %18 = vsyncpa [#allocation9], 0
    %s19 = scalar_lea.sflag [#allocation9], 1
    %20 = vsyncpa %s19, 0
    loop: start=0, step=1, limit=4
    $region2: #{tpu_custom_call.1} parent=1 // loop_pre_header
      _
    $region3: #{tpu_custom_call.1} parent=1 // loop_header
      %s22 = sphi 0, %s26
      %p23 = scmp.ge.s32.totalorder %s22, 4
      %s29 = sphi 0, %s41
      %s30 = sphi 0, %s37
      %s31 = sphi 0, %s29
      %s32 = sphi 0, %s30
      %s33 = sphi 0, %s31
      %s34 = sphi 0, %s32
      %s46 = sphi 0, %s48
      %s49 = sphi 0, %s46
      %s50 = sphi 0, %s49
      %s66 = sphi 0, %s50
      %s70 = sphi 0, %s70
      %s72 = sphi 0, %s70
      %s73 = sphi 0, %s72
      %s87 = sphi 0, %s73
      %s91 = sphi 0, %s91
      %s93 = sphi 0, %s91
      %s94 = sphi 0, %s93
      %s108 = sphi 0, %s94
      %s116 = sphi 0, %s118
      %s119 = sphi 0, %s116
      %s120 = sphi 0, %s119
      %s136 = sphi 0, %s120
      %s144 = sphi 0, %s146
      %s147 = sphi 0, %s144
      %s148 = sphi 0, %s147
      %s164 = sphi 0, %s148
      %s172 = sphi 0, %s174
      %s175 = sphi 0, %s172
      %s176 = sphi 0, %s175
      %s192 = sphi 0, %s176
    $region4: #{tpu_custom_call.1} parent=1 // loop_header_branch
      %25 = sbr.rel (%p23) target = $region8
    $region5: #{tpu_custom_call.1} parent=1 // loop_body
      %s27 = ssub.s32 %s22, 1
      %s28 = ssub.s32 %s22, 2
      %s35 = sadd.s32 1, %s30
      %p36 = scmp.ge.s32.totalorder %s35, 1
      %s37 = scalar_select %p36, 0, %s35
      %s38 = sadd.s32 1, %s29
      %s39 = scalar_select %p36, %s38, %s29
      %p40 = scmp.ge.s32.totalorder %s39, 2
      %s41 = scalar_select %p40, 0, %s39
      %s42 = ssub.s32 %s29, %s41
      %s43 = ssub.s32 %s30, %s37
      %s44 = sor.u32 %s42, %s43
      %p45 = scmp.eq.s32.totalorder %s44, 0
      %s47 = sadd.s32 %s46, 1
      %s48 = scalar_select %p45, %s46, %s47
      %p51 = pneg %p45
      %p52 = scmp.eq.s32.totalorder %s22, 1
      %p53 = por %p51, %p52
      %p54 = scmp.ne.s32.totalorder %s46, %s49
      %p55 = scmp.eq.s32.totalorder %s22, 0
      %p56 = por %p54, %p55
      %p57 = scmp.ne.s32.totalorder %s46, %s49
      %p58 = scmp.eq.s32.totalorder %s27, 1
      %p59 = por %p57, %p58
      %p60 = scmp.ne.s32.totalorder %s49, %s50
      %p61 = scmp.eq.s32.totalorder %s27, 0
      %p62 = por %p60, %p61
      %p63 = scmp.ne.s32.totalorder %s49, %s50
      %p64 = scmp.eq.s32.totalorder %s28, 1
      %p65 = por %p63, %p64
      %p67 = scmp.ne.s32.totalorder %s50, %s66
      %p68 = scmp.eq.s32.totalorder %s28, 0
      %p69 = por %p67, %p68
      %s71 = sadd.s32 %s70, 1
      %p74 = scmp.eq.s32.totalorder %s22, 1
      %p75 = scmp.ne.s32.totalorder %s70, %s72
      %p76 = scmp.eq.s32.totalorder %s22, 0
      %p77 = por %p75, %p76
      %p78 = scmp.ne.s32.totalorder %s70, %s72
      %p79 = scmp.eq.s32.totalorder %s27, 1
      %p80 = por %p78, %p79
      %p81 = scmp.ne.s32.totalorder %s72, %s73
      %p82 = scmp.eq.s32.totalorder %s27, 0
      %p83 = por %p81, %p82
      %p84 = scmp.ne.s32.totalorder %s72, %s73
      %p85 = scmp.eq.s32.totalorder %s28, 1
      %p86 = por %p84, %p85
      %p88 = scmp.ne.s32.totalorder %s73, %s87
      %p89 = scmp.eq.s32.totalorder %s28, 0
      %p90 = por %p88, %p89
      %s92 = sadd.s32 %s91, 1
      %p95 = scmp.eq.s32.totalorder %s22, 1
      %p96 = scmp.ne.s32.totalorder %s91, %s93
      %p97 = scmp.eq.s32.totalorder %s22, 0
      %p98 = por %p96, %p97
      %p99 = scmp.ne.s32.totalorder %s91, %s93
      %p100 = scmp.eq.s32.totalorder %s27, 1
      %p101 = por %p99, %p100
      %p102 = scmp.ne.s32.totalorder %s93, %s94
      %p103 = scmp.eq.s32.totalorder %s27, 0
      %p104 = por %p102, %p103
      %p105 = scmp.ne.s32.totalorder %s93, %s94
      %p106 = scmp.eq.s32.totalorder %s28, 1
      %p107 = por %p105, %p106
      %p109 = scmp.ne.s32.totalorder %s94, %s108
      %p110 = scmp.eq.s32.totalorder %s28, 0
      %p111 = por %p109, %p110
      %s112 = ssub.s32 %s29, %s41
      %s113 = ssub.s32 %s30, %s37
      %s114 = sor.u32 %s112, %s113
      %p115 = scmp.eq.s32.totalorder %s114, 0
      %s117 = sadd.s32 %s116, 1
      %s118 = scalar_select %p115, %s116, %s117
      %p121 = pneg %p115
      %p122 = scmp.eq.s32.totalorder %s22, 1
      %p123 = por %p121, %p122
      %p124 = scmp.ne.s32.totalorder %s116, %s119
      %p125 = scmp.eq.s32.totalorder %s22, 0
      %p126 = por %p124, %p125
      %p127 = scmp.ne.s32.totalorder %s116, %s119
      %p128 = scmp.eq.s32.totalorder %s27, 1
      %p129 = por %p127, %p128
      %p130 = scmp.ne.s32.totalorder %s119, %s120
      %p131 = scmp.eq.s32.totalorder %s27, 0
      %p132 = por %p130, %p131
      %p133 = scmp.ne.s32.totalorder %s119, %s120
      %p134 = scmp.eq.s32.totalorder %s28, 1
      %p135 = por %p133, %p134
      %p137 = scmp.ne.s32.totalorder %s120, %s136
      %p138 = scmp.eq.s32.totalorder %s28, 0
      %p139 = por %p137, %p138
      %s140 = ssub.s32 %s29, %s41
      %s141 = ssub.s32 %s30, %s37
      %s142 = sor.u32 %s140, %s141
      %p143 = scmp.eq.s32.totalorder %s142, 0
      %s145 = sadd.s32 %s144, 1
      %s146 = scalar_select %p143, %s144, %s145
      %p149 = pneg %p143
      %p150 = scmp.eq.s32.totalorder %s22, 1
      %p151 = por %p149, %p150
      %p152 = scmp.ne.s32.totalorder %s144, %s147
      %p153 = scmp.eq.s32.totalorder %s22, 0
      %p154 = por %p152, %p153
      %p155 = scmp.ne.s32.totalorder %s144, %s147
      %p156 = scmp.eq.s32.totalorder %s27, 1
      %p157 = por %p155, %p156
      %p158 = scmp.ne.s32.totalorder %s147, %s148
      %p159 = scmp.eq.s32.totalorder %s27, 0
      %p160 = por %p158, %p159
      %p161 = scmp.ne.s32.totalorder %s147, %s148
      %p162 = scmp.eq.s32.totalorder %s28, 1
      %p163 = por %p161, %p162
      %p165 = scmp.ne.s32.totalorder %s148, %s164
      %p166 = scmp.eq.s32.totalorder %s28, 0
      %p167 = por %p165, %p166
      %s168 = ssub.s32 %s29, %s41
      %s169 = ssub.s32 %s30, %s37
      %s170 = sor.u32 %s168, %s169
      %p171 = scmp.eq.s32.totalorder %s170, 0
      %s173 = sadd.s32 %s172, 1
      %s174 = scalar_select %p171, %s172, %s173
      %p177 = pneg %p171
      %p178 = scmp.eq.s32.totalorder %s22, 1
      %p179 = por %p177, %p178
      %p180 = scmp.ne.s32.totalorder %s172, %s175
      %p181 = scmp.eq.s32.totalorder %s22, 0
      %p182 = por %p180, %p181
      %p183 = scmp.ne.s32.totalorder %s172, %s175
      %p184 = scmp.eq.s32.totalorder %s27, 1
      %p185 = por %p183, %p184
      %p186 = scmp.ne.s32.totalorder %s175, %s176
      %p187 = scmp.eq.s32.totalorder %s27, 0
      %p188 = por %p186, %p187
      %p189 = scmp.ne.s32.totalorder %s175, %s176
      %p190 = scmp.eq.s32.totalorder %s28, 1
      %p191 = por %p189, %p190
      %p193 = scmp.ne.s32.totalorder %s176, %s192
      %p194 = scmp.eq.s32.totalorder %s28, 0
      %p195 = por %p193, %p194
      %p196 = scmp.le.s32.totalorder 1, %s22
      %p197 = scmp.lt.s32.totalorder %s22, 3
      %p198 = pnand %p196, %p197
      %p199 = pneg %p198
      // Predicated region
      $region9: #{tpu_custom_call.1} parent=5 // pred_check
        _
      $region10: #{tpu_custom_call.1} parent=5 // pred_check_branch
        %201 = sbr.rel (%p198) target = $region12
      $region11: #{tpu_custom_call.1} parent=5 // pred_region
        %s202 = ssub.s32 %s22, 1
        // Predicated region
        $region13: #{tpu_custom_call.1} parent=11 // pred_check
          %p203 = pneg %p83
        $region14: #{tpu_custom_call.1} parent=11 // pred_check_branch
          %205 = sbr.rel (%p203) target = $region16
        $region15: #{tpu_custom_call.1} parent=11 // pred_region
          %s207 = ssub.s32 256, 256
          %208 = vsyncadd [#allocation6], %s207
          %s209 = sshll.u32 [#allocation5], 4
          %s210 = int_to_ptr.vmem [resolvable:$true] %s209
          %215 = dma.hbm_to_vmem [thread:$0]  %s1, 256, %s210, [#allocation6], 64, 64, 4
        $region16: #{tpu_custom_call.1} parent=11 // pred_fallthru
          _
        // Predicated region
        $region17: #{tpu_custom_call.1} parent=11 // pred_check
          %p216 = pneg %p104
        $region18: #{tpu_custom_call.1} parent=11 // pred_check_branch
          %218 = sbr.rel (%p216) target = $region20
        $region19: #{tpu_custom_call.1} parent=11 // pred_region
          _
        $region20: #{tpu_custom_call.1} parent=11 // pred_fallthru
          _
      $region12: #{tpu_custom_call.1} parent=5 // pred_fallthru
        _
      %p219 = scmp.lt.s32.totalorder %s22, 2
      // Predicated region
      $region21: #{tpu_custom_call.1} parent=5 // pred_check
        %p220 = pneg %p219
      $region22: #{tpu_custom_call.1} parent=5 // pred_check_branch
        %222 = sbr.rel (%p220) target = $region24
      $region23: #{tpu_custom_call.1} parent=5 // pred_region
        // Predicated region
        $region25: #{tpu_custom_call.1} parent=23 // pred_check
          %p223 = pneg %p56
        $region26: #{tpu_custom_call.1} parent=23 // pred_check_branch
          %225 = sbr.rel (%p223) target = $region28
        $region27: #{tpu_custom_call.1} parent=23 // pred_region
          %s226 = sand.u32 %s46, 1
          %s227 = scalar_lea.sflag [#allocation3], %s226
          %s228 = sand.u32 %s46, 1
          %s229 = smul.addr %s228, 8
          %s230 = scalar_lea.vmem [#allocation2], %s229
          %s232 = ssub.s32 128, 128
          %233 = vsyncadd %s227, %s232
          %s234 = sadd.s32 %s30, %s29
          %s235 = smul.addr %s234, 128
          %s236 = scalar_lea.hbm %s0, %s235
          %s238 = sshll.u32 %s230, 4
          %s239 = int_to_ptr.vmem [resolvable:$true] %s238
          %241 = dma.hbm_to_vmem [thread:$0]  %s236, 128, %s239, %s227
        $region28: #{tpu_custom_call.1} parent=23 // pred_fallthru
          _
      $region24: #{tpu_custom_call.1} parent=5 // pred_fallthru
        _
      %p242 = scmp.le.s32.totalorder 1, %s22
      %p243 = scmp.lt.s32.totalorder %s22, 3
      %p244 = pnand %p242, %p243
      %p245 = pneg %p244
      // Predicated region
      $region29: #{tpu_custom_call.1} parent=5 // pred_check
        _
      $region30: #{tpu_custom_call.1} parent=5 // pred_check_branch
        %247 = sbr.rel (%p244) target = $region32
      $region31: #{tpu_custom_call.1} parent=5 // pred_region
        %s248 = ssub.s32 %s22, 1
        %s249 = sand.u32 %s49, 1
        %s250 = scalar_lea.sflag [#allocation3], %s249
        %s251 = sand.u32 %s49, 1
        %s252 = smul.addr %s251, 8
        %s253 = scalar_lea.vmem [#allocation2], %s252
        // Predicated region
        $region33: #{tpu_custom_call.1} parent=31 // pred_check
          %p254 = pneg %p62
        $region34: #{tpu_custom_call.1} parent=31 // pred_check_branch
          %256 = sbr.rel (%p254) target = $region36
        $region35: #{tpu_custom_call.1} parent=31 // pred_region
          %257 = dma.done %s250, 128
        $region36: #{tpu_custom_call.1} parent=31 // pred_fallthru
          _
        // Predicated region
        $region37: #{tpu_custom_call.1} parent=31 // pred_check
          %p258 = pneg %p83
        $region38: #{tpu_custom_call.1} parent=31 // pred_check_branch
          %260 = sbr.rel (%p258) target = $region40
        $region39: #{tpu_custom_call.1} parent=31 // pred_region
          %261 = dma.done [#allocation6], 256
        $region40: #{tpu_custom_call.1} parent=31 // pred_fallthru
          _
        %s262 = sand.u32 %s49, 1
        %s263 = scalar_lea.sflag [#allocation3], %s262
        %s264 = sand.u32 %s49, 1
        %s265 = smul.addr %s264, 8
        %s266 = scalar_lea.vmem [#allocation2], %s265
        %p267 = pneg %p62
        %p268 = pneg %p59
        %p269 = pneg %p83
        %p270 = pneg %p80
        %p271 = pneg %p104
        %p272 = pneg %p101
        %p273 = pneg %p132
        %p274 = pneg %p129
        %s275 = sand.u32 %s119, 1
        %s276 = scalar_lea.sflag [#allocation4], %s275
        %s277 = sand.u32 %s119, 1
        %s278 = smul.addr %s277, 4
        %s279 = scalar_lea.vmem [#allocation7], %s278
        %p280 = pneg %p160
        %p281 = pneg %p157
        %s282 = sand.u32 %s27, 1
        %s283 = scalar_lea.sflag [#allocation9], %s282
        %s284 = sand.u32 %s147, 1
        %s285 = smul.addr %s284, 4
        %s286 = scalar_lea.vmem [#allocation8], %s285
        %p287 = pneg %p188
        %p288 = pneg %p185
        %s289 = sand.u32 %s27, 1
        %s290 = scalar_lea.sflag [#allocation9], %s289
        %s291 = sand.u32 %s175, 1
        %s292 = smul.addr %s291, 4
        %s293 = scalar_lea.vmem [#allocation10], %s292
        %v295 = vld [vmem:[%s253] sm:$0xff]
        %v296 = vpack.c.bf16 %v295, %v295
        %v297 = vld [vmem:[#allocation5] sm:$0xf]
        %v298 = vld [vmem:[#allocation5 + $0x4] sm:$0xf]
        %v299 = vld [vmem:[#allocation5 + $0x8] sm:$0xf]
        %v300 = vld [vmem:[#allocation5 + $0xc] sm:$0xf]
        %v301 = vld [vmem:[%s2] sm:$0x1]
        %v303 = vlaneseq
        %v304 = vshrl.u32 %v303, 7
        %v305 = vsub.s32 0, %v304
        %v306 = vrot.slane %v301, %v305
        %v312 = vunpack.c.l.b16 %v297
        %v313 = vunpack.c.l.b16 %v298
        %v314 = vunpack.c.l.b16 %v299
        %v315 = vunpack.c.l.b16 %v300
        %v316 = vpack.c.b16 %v313, %v312
        %v317 = vpack.c.b16 %v315, %v314
        %vm320 = vcmask 261120
        %v322 = vsel %vm320, %v296, 0
        %324 = vmatprep.subr.bf16.mxu0 0
        %325 = vmatpush1.bf16.msra.mxu0 %v316
        %326 = vmatprep.subr.bf16.mxu0 0
        %327 = vmatpush1.bf16.msra.mxu0 %v317
        %328 = vmatprep.subr.bf16.mxu0 0
        %329 = vmatpush1.bf16.msra.mxu0 0
        %330 = vmatprep.subr.bf16.mxu0 0
        %331 = vmatpush1.bf16.msra.mxu0 0
        %332 = vmatprep.subr.bf16.mxu0 0
        %333 = vmatpush1.bf16.msra.mxu0 0
        %334 = vmatprep.subr.bf16.mxu0 0
        %335 = vmatpush1.bf16.msra.mxu0 0
        %336 = vmatprep.subr.bf16.mxu0 0
        %337 = vmatpush1.bf16.msra.mxu0 0
        %338 = vmatprep.subr.bf16.mxu0 0
        %339 = vmatpush1.bf16.msra.mxu0 0
        %340 = vmatprep.subr.bf16.mxu0 0
        %341 = vmatpush1.bf16.msra.mxu0 0
        %342 = vmatprep.subr.bf16.mxu0 0
        %343 = vmatpush1.bf16.msra.mxu0 0
        %344 = vmatprep.subr.bf16.mxu0 0
        %345 = vmatpush1.bf16.msra.mxu0 0
        %346 = vmatprep.subr.bf16.mxu0 0
        %347 = vmatpush1.bf16.msra.mxu0 0
        %348 = vmatprep.subr.bf16.mxu0 0
        %349 = vmatpush1.bf16.msra.mxu0 0
        %350 = vmatprep.subr.bf16.mxu0 0
        %351 = vmatpush1.bf16.msra.mxu0 0
        %352 = vmatprep.subr.bf16.mxu0 0
        %353 = vmatpush1.bf16.msra.mxu0 0
        %354 = vmatprep.subr.bf16.mxu0 0
        %355 = vmatpush1.bf16.msra.mxu0 0
        %356 = vmatprep.mubr.bf16.mxu0 0
        %357 = vmatmul.mubr.bf16.gmra.mrb[0].mxu0 %v322
        %v358 = vpop.f32.mrb[0].mxu0
        %v359 = vadd.f32 %v306, %v358
        %v360 = vpop.f32.mrb[0].mxu0
        %v361 = vpop.f32.mrb[0].mxu0
        %v362 = vpop.f32.mrb[0].mxu0
        %363 = vdwg.mxu0
        %v364 = vmul.f32 %v359, 0.35355338
        %v365 = vpack.c.bf16 %v364, %v364
        %vm366 = vcmask 257024
        %367 = vst.msk [vmem:[%s279] sm:$0xf] %vm366, %v365
        %v368 = vpack.c.bf16 %v359, %v359
        %v370 = vunpack.c.l.b16 %v368
        %v371 = vpack.c.b16 %v370, %v370
        %372 = vrot.lane.b32.xlu0 %v371, 96
        %v373 = vpop.permute.xlu0 %372
        %375 = vst.msk [vmem:[%s286] sm:$0xf] %vm366, %v373
        %376 = vrot.lane.b32.xlu0 %v371, 64
        %v377 = vpop.permute.xlu0 %376
        %379 = vst.msk [vmem:[%s293] sm:$0xf] %vm366, %v377
        %s380 = sand.u32 %s119, 1
        %s381 = scalar_lea.sflag [#allocation4], %s380
        %s382 = sand.u32 %s119, 1
        %s383 = smul.addr %s382, 4
        %s384 = scalar_lea.vmem [#allocation7], %s383
        %s385 = sand.u32 %s27, 1
        %s386 = scalar_lea.sflag [#allocation9], %s385
        %s387 = sand.u32 %s147, 1
        %s388 = smul.addr %s387, 4
        %s389 = scalar_lea.vmem [#allocation8], %s388
        %s390 = sand.u32 %s27, 1
        %s391 = scalar_lea.sflag [#allocation9], %s390
        %s392 = sand.u32 %s175, 1
        %s393 = smul.addr %s392, 4
        %s394 = scalar_lea.vmem [#allocation10], %s393
        // Predicated region
        $region41: #{tpu_custom_call.1} parent=31 // pred_check
          %p395 = pneg %p129
        $region42: #{tpu_custom_call.1} parent=31 // pred_check_branch
          %397 = sbr.rel (%p395) target = $region44
        $region43: #{tpu_custom_call.1} parent=31 // pred_region
          %s399 = ssub.s32 64, 64
          %400 = vsyncadd %s381, %s399
          %s401 = sadd.s32 %s32, %s31
          %s402 = smul.addr %s401, 64
          %s403 = scalar_lea.hbm %s3, %s402
          %s405 = sshll.u32 %s384, 4
          %s406 = int_to_ptr.vmem [resolvable:$true] %s405
          %408 = dma.vmem_to_hbm [thread:$0]  %s406, 64, %s403, %s381
        $region44: #{tpu_custom_call.1} parent=31 // pred_fallthru
          _
        // Predicated region
        $region45: #{tpu_custom_call.1} parent=31 // pred_check
          %p409 = pneg %p157
        $region46: #{tpu_custom_call.1} parent=31 // pred_check_branch
          %411 = sbr.rel (%p409) target = $region48
        $region47: #{tpu_custom_call.1} parent=31 // pred_region
          %s413 = ssub.s32 64, 64
          %414 = vsyncadd %s386, %s413
          %s415 = sadd.s32 %s32, %s31
          %s416 = smul.addr %s415, 64
          %s417 = scalar_lea.hbm %s4, %s416
          %s419 = sshll.u32 %s389, 4
          %s420 = int_to_ptr.vmem [resolvable:$true] %s419
          %422 = dma.vmem_to_hbm [thread:$0]  %s420, 64, %s417, %s386
        $region48: #{tpu_custom_call.1} parent=31 // pred_fallthru
          _
        // Predicated region
        $region49: #{tpu_custom_call.1} parent=31 // pred_check
          %p423 = pneg %p185
        $region50: #{tpu_custom_call.1} parent=31 // pred_check_branch
          %425 = sbr.rel (%p423) target = $region52
        $region51: #{tpu_custom_call.1} parent=31 // pred_region
          %s427 = ssub.s32 64, 64
          %428 = vsyncadd %s391, %s427
          %s429 = sadd.s32 %s32, %s31
          %s430 = smul.addr %s429, 64
          %s431 = scalar_lea.hbm %s5, %s430
          %s433 = sshll.u32 %s394, 4
          %s434 = int_to_ptr.vmem [resolvable:$true] %s433
          %436 = dma.vmem_to_hbm [thread:$0]  %s434, 64, %s431, %s391
        $region52: #{tpu_custom_call.1} parent=31 // pred_fallthru
          _
      $region32: #{tpu_custom_call.1} parent=5 // pred_fallthru
        _
      %p437 = scmp.le.s32.totalorder 2, %s22
      // Predicated region
      $region53: #{tpu_custom_call.1} parent=5 // pred_check
        %p438 = pneg %p437
      $region54: #{tpu_custom_call.1} parent=5 // pred_check_branch
        %440 = sbr.rel (%p438) target = $region56
      $region55: #{tpu_custom_call.1} parent=5 // pred_region
        %s441 = ssub.s32 %s22, 2
        // Predicated region
        $region57: #{tpu_custom_call.1} parent=55 // pred_check
          %p442 = pneg %p135
        $region58: #{tpu_custom_call.1} parent=55 // pred_check_branch
          %444 = sbr.rel (%p442) target = $region60
        $region59: #{tpu_custom_call.1} parent=55 // pred_region
          %s445 = sand.u32 %s120, 1
          %s446 = scalar_lea.sflag [#allocation4], %s445
          %s447 = sand.u32 %s120, 1
          %s448 = smul.addr %s447, 4
          %s449 = scalar_lea.vmem [#allocation7], %s448
          %450 = dma.done %s446, 64
        $region60: #{tpu_custom_call.1} parent=55 // pred_fallthru
          _
        // Predicated region
        $region61: #{tpu_custom_call.1} parent=55 // pred_check
          %p451 = pneg %p163
        $region62: #{tpu_custom_call.1} parent=55 // pred_check_branch
          %453 = sbr.rel (%p451) target = $region64
        $region63: #{tpu_custom_call.1} parent=55 // pred_region
          %s454 = sand.u32 %s28, 1
          %s455 = scalar_lea.sflag [#allocation9], %s454
          %s456 = sand.u32 %s148, 1
          %s457 = smul.addr %s456, 4
          %s458 = scalar_lea.vmem [#allocation8], %s457
          %459 = dma.done %s455, 64
        $region64: #{tpu_custom_call.1} parent=55 // pred_fallthru
          _
        // Predicated region
        $region65: #{tpu_custom_call.1} parent=55 // pred_check
          %p460 = pneg %p191
        $region66: #{tpu_custom_call.1} parent=55 // pred_check_branch
          %462 = sbr.rel (%p460) target = $region68
        $region67: #{tpu_custom_call.1} parent=55 // pred_region
          %s463 = sand.u32 %s28, 1
          %s464 = scalar_lea.sflag [#allocation9], %s463
          %s465 = sand.u32 %s176, 1
          %s466 = smul.addr %s465, 4
          %s467 = scalar_lea.vmem [#allocation10], %s466
          %468 = dma.done %s464, 64
        $region68: #{tpu_custom_call.1} parent=55 // pred_fallthru
          _
      $region56: #{tpu_custom_call.1} parent=5 // pred_fallthru
        _
    $region6: #{tpu_custom_call.1} parent=1 // loop_footer
      %s26 = sadd.s32 1, %s22
    $region7: #{tpu_custom_call.1} parent=1 // loop_footer_branch
      %21 = sbr.rel target = $region3
    $region8: #{tpu_custom_call.1} parent=1 // loop_exit
      _
    %469 = vsyncpa [#allocation3], 1
    %s470 = scalar_lea.sflag [#allocation3], 1
    %471 = vsyncpa %s470, 1
    %472 = vsyncpa [#allocation6], 1
    %473 = vsyncpa [#allocation4], 1
    %s474 = scalar_lea.sflag [#allocation4], 1
    %475 = vsyncpa %s474, 1
    %476 = vsyncpa [#allocation9], 1
    %s477 = scalar_lea.sflag [#allocation9], 1
    %478 = vsyncpa %s477, 1

</llo_original>
